<compile_context>
chip_gen: v5e
topology: v5e:2x2
jax: 0.10.0
libtpu: 0.0.40
codegen_flags: <defaults>
</compile_context>

<pallas_src>
import functools
import math

import jax
import jax.numpy as jnp
from jax import lax
from jax.experimental import pallas as pl
from jax.experimental.pallas import tpu as pltpu


def _round_up(x, m):
    return (x + m - 1) // m * m


def _pad_axis(x, axis, target):
    pad = target - x.shape[axis]
    if pad <= 0:
        return x
    widths = [(0, 0)] * x.ndim
    widths[axis] = (0, pad)
    return jnp.pad(x, widths)


def _vmem_capacity_bytes():
    """Physical per-core VMEM (64 MiB v7x, 128 MiB v5e/v6e); conservative fallback."""
    try:
        cap = int(pltpu.get_tpu_info().vmem_capacity_bytes)
        if cap > 0:
            return cap
    except Exception:
        pass
    return 64 << 20  # assume the smallest (v7x per-TC) if the query is unavailable


def _vmem_estimate(tb, np_, fp, pp, p_chunk):
    """Rough per-step VMEM footprint (bytes)."""
    weight_bytes = fp * pp * 2 + pp * 4                       # wi (bf16) + wa (f32), single-buffered
    io_bytes = 2 * (tb * np_ * fp * 2                          # img tile (bf16), double-buffered
                    + tb * pp * 4                              # pq tile (f32)
                    + 2 * tb * np_ * 4)                        # out (+mask) tiles (f32)
    temp_bytes = 3 * tb * np_ * p_chunk * 4                    # pi/h chunk temporaries (f32)
    return weight_bytes + io_bytes + temp_bytes


def _choose_batch_tile(B, np_, fp, pp, p_chunk, vmem_cap):
    # Smallest multiple-of-8 tile whose image-GEMM M dim (tb*Np) is 256-aligned
    # (full 256-row MXU passes on v6e/v7x; 256 is also 128-aligned for v5e).
    tb = _round_up(256 // math.gcd(np_, 256), 8)
    # Keep >= 4 grid steps when the batch is big enough (v7x: 2 TCs shard the grid axis).
    if B < 4 * tb and B >= 4 * 8:
        tb = min(tb, _round_up(-(-B // 4), 8))
    tb = min(tb, _round_up(B, 8))          # never exceed the (padded) batch
    # Shrink (multiples of 8) until the estimate fits ~half of physical VMEM
    # (headroom for compiler scratch and the double-buffered pipeline).
    while tb > 8 and _vmem_estimate(tb, np_, fp, pp, p_chunk) > vmem_cap // 2:
        tb -= 8
    return tb


def _logits_chunked(pq_ref, img_ref, wi_ref, wa_ref, tb, n_pad, p_chunk):
    """logits[b, n] = sum_p tanh(pi[b, n, p] + pq[b, p]) * wa[p], chunked over p."""
    pp = wi_ref.shape[1]
    img = img_ref[...]                                                   # (tb*Np, Fp) bf16
    logits = jnp.zeros((tb, n_pad), jnp.float32)
    for c in range(0, pp, p_chunk):
        pc = min(p_chunk, pp - c)
        wi_c = wi_ref[:, c:c + pc]                                       # (Fp, pc) bf16
        pq_c = pq_ref[:, c:c + pc]                                       # (tb, pc) f32
        wa_c = wa_ref[:, c:c + pc]                                       # (1, pc)  f32
        pi_c = jnp.dot(img, wi_c, preferred_element_type=jnp.float32)    # (tb*Np, pc) f32
        h_c = jnp.tanh(pi_c.reshape(tb, n_pad, pc) + pq_c[:, None, :])   # (tb, Np, pc)
        logits = logits + jnp.sum(h_c * wa_c, axis=-1)                   # (tb, Np)
    return logits


def _attn_kernel(pq_ref, img_ref, wi_ref, wa_ref, out_ref, *, n_boxes, p_chunk):
    tb, n_pad = out_ref.shape
    logits = _logits_chunked(pq_ref, img_ref, wi_ref, wa_ref, tb, n_pad, p_chunk)

    if n_pad != n_boxes:
        # Padded (nonexistent) boxes drop out of the softmax exactly.
        col = lax.broadcasted_iota(jnp.int32, (tb, n_pad), 1)
        logits = jnp.where(col < n_boxes, logits, -1e30)

    m = jnp.max(logits, axis=-1, keepdims=True)
    e = jnp.exp(logits - m)
    denom = jnp.sum(e, axis=-1, keepdims=True)
    out_ref[...] = (e * pl.reciprocal(denom, approx=True)).astype(out_ref.dtype)


def _attn_kernel_masked(pq_ref, img_ref, mask_ref, wi_ref, wa_ref, out_ref, *,
                        n_boxes, p_chunk):
    # AllenNLP masked_softmax: p = softmax(logits*mask); p *= mask; p /= (sum(p)+1e-13)
    tb, n_pad = out_ref.shape
    logits = _logits_chunked(pq_ref, img_ref, wi_ref, wa_ref, tb, n_pad, p_chunk)

    mask = mask_ref[...]                                                 # (tb, Np) f32
    masked_logits = logits * mask
    if n_pad != n_boxes:
        # Drop padded columns so z matches the reference sum over the N real boxes.
        col = lax.broadcasted_iota(jnp.int32, (tb, n_pad), 1)
        masked_logits = jnp.where(col < n_boxes, masked_logits, -1e30)

    m = jnp.max(masked_logits, axis=-1, keepdims=True)
    e = jnp.exp(masked_logits - m)
    z = jnp.sum(e, axis=-1, keepdims=True)
    em = e * mask
    # (em/z) / (sum(em)/z + 1e-13)  ==  em / (sum(em) + 1e-13*z)  -> single reciprocal.
    denom = jnp.sum(em, axis=-1, keepdims=True) + 1e-13 * z
    out_ref[...] = (em * pl.reciprocal(denom, approx=True)).astype(out_ref.dtype)


def bottom_up_top_down_attention(query_vector, image_features, wq, wi, wa,
                                 image_features_mask=None, *, batch_tile=None,
                                 p_chunk=256):
    """query_vector (B,Q); image_features (B,N,F); wq (Q,P); wi (F,P); wa (P,) or (P,1).

    Weights are stored as (in_dim, out_dim), i.e. transposed vs. nn.Linear.weight.
    Returns (B, N) float32 attention weights.
    """
    B, Q = query_vector.shape
    _, N, F = image_features.shape
    P = wq.shape[1]

    # Lane-align contraction/projection dims; sublane-align the box dim.
    Fp, Pp = _round_up(F, 128), _round_up(P, 128)
    Np = _round_up(N, 8)
    p_chunk_eff = min(_round_up(p_chunk, 128), Pp)

    vmem_cap = _vmem_capacity_bytes()
    if batch_tile is None:
        tb = _choose_batch_tile(B, Np, Fp, Pp, p_chunk_eff, vmem_cap)
    else:
        tb = int(batch_tile)
    Bp = _round_up(B, tb)

    # MXU-facing operands in bf16 (f32 accumulation inside the GEMMs).
    q_bf = query_vector.astype(jnp.bfloat16)
    wq_bf = wq.astype(jnp.bfloat16)
    wi_bf = wi.astype(jnp.bfloat16)
    img_bf = image_features.astype(jnp.bfloat16)
    wa_row = wa.reshape(1, -1).astype(jnp.float32)

    # Hoisted query projection: one (B,Q)x(Q,P) XLA GEMM for the whole batch.
    pq = jnp.dot(q_bf, wq_bf, preferred_element_type=jnp.float32)          # (B, P) f32
    pq_p = _pad_axis(_pad_axis(pq, 1, Pp), 0, Bp)                          # (Bp, Pp)

    # TODO(synk): for production (N % 8 != 0 or B % tb != 0) pad the image features
    # once where they are produced/cached instead of re-writing the full tensor in
    # HBM on every call.
    img_p = _pad_axis(_pad_axis(_pad_axis(img_bf, 2, Fp), 1, Np), 0, Bp)   # (Bp, Np, Fp)
    img_flat = img_p.reshape(Bp * Np, Fp)                                  # (Bp*Np, Fp)
    wi_p = _pad_axis(_pad_axis(wi_bf, 0, Fp), 1, Pp)                       # (Fp, Pp) bf16
    wa_p = _pad_axis(wa_row, 1, Pp)                                        # (1, Pp)  f32

    grid = (Bp // tb,)
    pq_spec = pl.BlockSpec((tb, Pp), lambda b: (b, 0))
    img_spec = pl.BlockSpec((tb * Np, Fp), lambda b: (b, 0))
    out_spec = pl.BlockSpec((tb, Np), lambda b: (b, 0))
    # Weights are constant across the grid: whole-array VMEM residents, not pipelined.
    weight_specs = [pl.BlockSpec(memory_space=pltpu.MemorySpace.VMEM)] * 2
    out_shape = jax.ShapeDtypeStruct((Bp, Np), jnp.float32)

    est = _vmem_estimate(tb, Np, Fp, Pp, p_chunk_eff)
    vmem_limit = int(min(max(est + est // 4, 16 << 20), (vmem_cap * 85) // 100))
    cparams = pltpu.CompilerParams(
        dimension_semantics=("parallel",),
        vmem_limit_bytes=vmem_limit,
    )

    if image_features_mask is None:
        kernel = functools.partial(_attn_kernel, n_boxes=N, p_chunk=p_chunk_eff)
        out = pl.pallas_call(
            kernel,
            out_shape=out_shape,
            grid_spec=pltpu.PrefetchScalarGridSpec(
                num_scalar_prefetch=0,
                grid=grid,
                in_specs=[pq_spec, img_spec] + weight_specs,
                out_specs=out_spec,
            ),
            compiler_params=cparams,
        )(pq_p, img_flat, wi_p, wa_p)
    else:
        mask_p = _pad_axis(
            _pad_axis(image_features_mask.astype(jnp.float32), 1, Np), 0, Bp)
        mask_spec = pl.BlockSpec((tb, Np), lambda b: (b, 0))
        kernel = functools.partial(_attn_kernel_masked, n_boxes=N, p_chunk=p_chunk_eff)
        out = pl.pallas_call(
            kernel,
            out_shape=out_shape,
            grid_spec=pltpu.PrefetchScalarGridSpec(
                num_scalar_prefetch=0,
                grid=grid,
                in_specs=[pq_spec, img_spec, mask_spec] + weight_specs,
                out_specs=out_spec,
            ),
            compiler_params=cparams,
        )(pq_p, img_flat, mask_p, wi_p, wa_p)

    return out[:B, :N]


if __name__ == "__main__":
    # Small, deterministic config.
    B = 2              # batch_size
    Q = 32             # query_size
    F = 64             # image_feature_size
    P = 32             # projection_size
    N = 8              # num_boxes

    key = jax.random.PRNGKey(0)
    k_q, k_img, k_wq, k_wi, k_wa = jax.random.split(key, 5)

    query_vector = jax.random.normal(k_q, (B, Q), dtype=jnp.float32)
    image_features = jax.random.normal(k_img, (B, N, F), dtype=jnp.float32)

    # Deterministic "nn.Linear(bias=False)" weights, stored as (in_dim, out_dim).
    wq = jax.random.normal(k_wq, (Q, P), dtype=jnp.float32) * 0.05
    wi = jax.random.normal(k_wi, (F, P), dtype=jnp.float32) * 0.05
    wa = jax.random.normal(k_wa, (P,), dtype=jnp.float32) * 0.05

    def reference(q, img, wq_, wi_, wa_, mask=None):
        pq = q @ wq_
        pi = jnp.einsum("bnf,fp->bnp", img, wi_)
        logits = jnp.einsum("bnp,p->bn", jnp.tanh(pq[:, None, :] + pi), wa_)
        if mask is None:
            return jax.nn.softmax(logits, axis=-1)
        p = jax.nn.softmax(logits * mask, axis=-1) * mask
        return p / (jnp.sum(p, axis=-1, keepdims=True) + 1e-13)

    # Unmasked path (image_features_mask=None).
    attn = bottom_up_top_down_attention(query_vector, image_features, wq, wi, wa)
    attn = jax.block_until_ready(attn)

    # Masked path (adaptive number of boxes per instance).
    mask = jnp.concatenate(
        [jnp.ones((B, N - 2), jnp.float32), jnp.zeros((B, 2), jnp.float32)], axis=-1)
    attn_masked = bottom_up_top_down_attention(
        query_vector, image_features, wq, wi, wa, image_features_mask=mask)
    attn_masked = jax.block_until_ready(attn_masked)

    # Sanity checks against a pure-JAX f32 reference (tolerances cover the bf16 MXU
    # operands and the approx EUP reciprocal).
    assert attn.shape == (B, N)
    assert attn_masked.shape == (B, N)
    assert jnp.all(jnp.abs(jnp.sum(attn, axis=-1) - 1.0) < 5e-3)
    assert jnp.all(attn_masked[:, -2:] < 1e-6)
    ref_u = reference(query_vector, image_features, wq, wi, wa)
    ref_m = reference(query_vector, image_features, wq, wi, wa, mask)
    assert jnp.allclose(attn, ref_u, atol=1e-2, rtol=5e-2)
    assert jnp.allclose(attn_masked, ref_m, atol=1e-2, rtol=5e-2)

    print("KERNEL_OK")
</pallas_src>

<mosaic_0001>
module attributes {stable_mosaic.version = 11 : i64} {
  func.func @_attn_kernel(%arg0: i32, %arg1: memref<8x128xf32, #tpu.memory_space<vmem>>, %arg2: memref<64x128xbf16, #tpu.memory_space<vmem>>, %arg3: memref<128x128xbf16, #tpu.memory_space<vmem>>, %arg4: memref<1x128xf32, #tpu.memory_space<vmem>>, %arg5: memref<8x8xf32, #tpu.memory_space<vmem>>) attributes {dimension_semantics = [#tpu.dimension_semantics<parallel>], iteration_bounds = array<i64: 1>, scalar_prefetch = 0 : i64, scratch_operands = 0 : i64, tpu.core_type = #tpu.core_type<tc>, window_params = [{transform_indices = @transform_0, window_bounds = array<i64: 8, 128>}, {transform_indices = @transform_1, window_bounds = array<i64: 64, 128>}, {pipeline_mode = #tpu.pipeline_mode<synchronous>, transform_indices = @transform_2, window_bounds = array<i64: 128, 128>}, {pipeline_mode = #tpu.pipeline_mode<synchronous>, transform_indices = @transform_3, window_bounds = array<i64: 1, 128>}, {transform_indices = @transform_4, window_bounds = array<i64: 8, 8>}]} {
    %c0 = arith.constant 0 : index
    %c0_0 = arith.constant 0 : index
    %0 = vector.load %arg2[%c0, %c0_0] : memref<64x128xbf16, #tpu.memory_space<vmem>>, vector<64x128xbf16>
    %cst = arith.constant 0.000000e+00 : f32
    %1 = vector.broadcast %cst : f32 to vector<8x8xf32>
    %c0_1 = arith.constant 0 : index
    %c0_2 = arith.constant 0 : index
    %2 = vector.load %arg3[%c0_1, %c0_2] : memref<128x128xbf16, #tpu.memory_space<vmem>>, vector<128x128xbf16>
    %c0_3 = arith.constant 0 : index
    %c0_4 = arith.constant 0 : index
    %3 = vector.load %arg1[%c0_3, %c0_4] : memref<8x128xf32, #tpu.memory_space<vmem>>, vector<8x128xf32>
    %c0_5 = arith.constant 0 : index
    %c0_6 = arith.constant 0 : index
    %4 = vector.load %arg4[%c0_5, %c0_6] : memref<1x128xf32, #tpu.memory_space<vmem>>, vector<1x128xf32>
    %cst_7 = arith.constant dense<0.000000e+00> : vector<64x128xf32>
    %5 = tpu.matmul %0, %2, %cst_7 {dimension_numbers = #tpu.dot_dimension_numbers<[1], [0], [0], [1], [0, 0, 1, 1], [], []>} : vector<64x128xbf16>, vector<128x128xbf16>, vector<64x128xf32> -> vector<64x128xf32>
    %6 = vector.shape_cast %5 : vector<64x128xf32> to vector<8x8x128xf32>
    %7 = vector.shape_cast %3 : vector<8x128xf32> to vector<8x1x128xf32>
    %8 = vector.broadcast %7 : vector<8x1x128xf32> to vector<8x8x128xf32>
    %9 = arith.addf %6, %8 : vector<8x8x128xf32>
    %10 = math.tanh %9 : vector<8x8x128xf32>
    %11 = vector.shape_cast %4 : vector<1x128xf32> to vector<1x1x128xf32>
    %12 = vector.broadcast %11 : vector<1x1x128xf32> to vector<8x8x128xf32>
    %13 = arith.mulf %10, %12 : vector<8x8x128xf32>
    %cst_8 = arith.constant dense<0.000000e+00> : vector<8x8xf32>
    %14 = vector.multi_reduction <add>, %13, %cst_8 [2] : vector<8x8x128xf32> to vector<8x8xf32>
    %15 = arith.addf %1, %14 : vector<8x8xf32>
    %cst_9 = arith.constant dense<0xFF800000> : vector<8xf32>
    %16 = vector.multi_reduction <maximumf>, %15, %cst_9 [1] : vector<8x8xf32> to vector<8xf32>
    %17 = vector.shape_cast %16 : vector<8xf32> to vector<8x1xf32>
    %18 = vector.broadcast %17 : vector<8x1xf32> to vector<8x8xf32>
    %19 = arith.subf %15, %18 : vector<8x8xf32>
    %20 = math.exp %19 : vector<8x8xf32>
    %cst_10 = arith.constant dense<0.000000e+00> : vector<8xf32>
    %21 = vector.multi_reduction <add>, %20, %cst_10 [1] : vector<8x8xf32> to vector<8xf32>
    %22 = vector.shape_cast %21 : vector<8xf32> to vector<8x1xf32>
    %23 = tpu.reciprocal %22 {approx = true} : vector<8x1xf32> -> vector<8x1xf32>
    %24 = vector.broadcast %23 : vector<8x1xf32> to vector<8x8xf32>
    %25 = arith.mulf %20, %24 : vector<8x8xf32>
    %c0_11 = arith.constant 0 : index
    %c0_12 = arith.constant 0 : index
    %26 = vector.load %arg5[%c0_11, %c0_12] : memref<8x8xf32, #tpu.memory_space<vmem>>, vector<8x8xf32>
    tpu.vector_store %arg5[%c0_11, %c0_12], %25 {strides = array<i32>} : memref<8x8xf32, #tpu.memory_space<vmem>>, vector<8x8xf32>,
    return
  }
  func.func @transform_0(%arg0: i32) -> (i32, i32) {
    %c0_i32 = arith.constant 0 : i32
    %c0_i32_0 = arith.constant 0 : i32
    return %arg0, %c0_i32 : i32, i32
  }
  func.func @transform_1(%arg0: i32) -> (i32, i32) {
    %c0_i32 = arith.constant 0 : i32
    %c0_i32_0 = arith.constant 0 : i32
    return %arg0, %c0_i32 : i32, i32
  }
  func.func @transform_2(%arg0: i32) -> (i32, i32) {
    %c0_i32 = arith.constant 0 : i32
    %c0_i32_0 = arith.constant 0 : i32
    %c0_i32_1 = arith.constant 0 : i32
    return %c0_i32, %c0_i32_0 : i32, i32
  }
  func.func @transform_3(%arg0: i32) -> (i32, i32) {
    %c0_i32 = arith.constant 0 : i32
    %c0_i32_0 = arith.constant 0 : i32
    %c0_i32_1 = arith.constant 0 : i32
    return %c0_i32, %c0_i32_0 : i32, i32
  }
  func.func @transform_4(%arg0: i32) -> (i32, i32) {
    %c0_i32 = arith.constant 0 : i32
    %c0_i32_0 = arith.constant 0 : i32
    return %arg0, %c0_i32 : i32, i32
  }
}

</mosaic_0001>

<llo_original>
// kernel: tpu_custom_call.1
$region0: #{tpu_custom_call.1}
  #allocation0 [shape = 'u32[]', space=smem, size = 0x4, offset = 0x4, fixed_abs, tag = 'smem constant byte address 0x4 - core index']
  #allocation1 [shape = 'u32[72,128]{1,0:T(1,128)}', space=vmem, size = 0x9000, scoped, tag = 'internal scratch']
  %s0 = inlined_call_operand.hbm [shape: f32[8,128], index: 0, kind: input, shape index: {}]
  %s1 = inlined_call_operand.hbm [shape: bf16[64,128], index: 1, kind: input, shape index: {}]
  %s2 = inlined_call_operand.hbm [shape: bf16[128,128], index: 2, kind: input, shape index: {}]
  %s3 = inlined_call_operand.vmem [shape: f32[1,128], index: 3, kind: input, shape index: {}]
  %s4 = inlined_call_operand.hbm [shape: f32[8,8], index: 4, kind: output, shape index: {}]
  %s5 = sld [smem:[#allocation0]]
  $region38: #{tpu_custom_call.1} parent=0
    _
  %s7 = ssub.s32 1, %s5
  %s8 = scalar_select 0, %s7, %s5
  $region1: #{tpu_custom_call.1} parent=0
    #allocation2 [shape = 'u8[4096]{0}', space=vmem, size = 0x1000, scoped, tag = 'input window, operand 0, single buffered']
    #allocation3 [shape = 's32[1]{0}', space=sflag, size = 0x4, scoped, tag = 'scoped memory for tpu_custom_call.1']
    #allocation4 [shape = 's32[1]{0}', space=sflag, size = 0x4, scoped, tag = 'scoped memory for tpu_custom_call.1']
    #allocation5 [shape = 'u8[16384]{0}', space=vmem, size = 0x4000, scoped, tag = 'input window, operand 1, single buffered']
    #allocation6 [shape = 's32[1]{0}', space=sflag, size = 0x4, scoped, tag = 'scoped memory for tpu_custom_call.1']
    #allocation7 [shape = 'u8[32768]{0}', space=vmem, size = 0x8000, scoped, tag = 'input window, operand 2, single buffered']
    #allocation8 [shape = 'u8[4096]{0}', space=vmem, size = 0x1000, scoped, tag = 'output window, operand 0, single buffered']
    %9 = vsyncpa [#allocation3], 0
    %10 = vsyncpa [#allocation6], 0
    %11 = vsyncpa [#allocation4], 0
    // Predicated region
    $region2: #{tpu_custom_call.1} parent=1 // pred_check
      _
    $region3: #{tpu_custom_call.1} parent=1 // pred_check_branch
      %13 = sbr.rel (0) target = $region5
    $region4: #{tpu_custom_call.1} parent=1 // pred_region
      %15 = vsyncadd [#allocation3], 0
      %s17 = sshll.u32 %s0, 4
      %s18 = int_to_ptr.hbm [resolvable:$true] %s17
      %s19 = sshll.u32 [#allocation2], 4
      %s20 = int_to_ptr.vmem [resolvable:$true] %s19
      %22 = dma.hbm_to_vmem [thread:$0]  %s18, 128, %s20, [#allocation3]
    $region5: #{tpu_custom_call.1} parent=1 // pred_fallthru
      _
    // Predicated region
    $region6: #{tpu_custom_call.1} parent=1 // pred_check
      _
    $region7: #{tpu_custom_call.1} parent=1 // pred_check_branch
      %24 = sbr.rel (0) target = $region9
    $region8: #{tpu_custom_call.1} parent=1 // pred_region
      %26 = vsyncadd [#allocation6], 0
      %s27 = sshll.u32 %s1, 4
      %s28 = int_to_ptr.hbm [resolvable:$true] %s27
      %s29 = sshll.u32 [#allocation5], 4
      %s30 = int_to_ptr.vmem [resolvable:$true] %s29
      %35 = dma.hbm_to_vmem [thread:$0]  %s28, 512, %s30, [#allocation6], 64, 64, 4
    $region9: #{tpu_custom_call.1} parent=1 // pred_fallthru
      _
    // Predicated region
    $region10: #{tpu_custom_call.1} parent=1 // pred_check
      _
    $region11: #{tpu_custom_call.1} parent=1 // pred_check_branch
      %37 = sbr.rel (0) target = $region13
    $region12: #{tpu_custom_call.1} parent=1 // pred_region
      %39 = vsyncadd [#allocation6], 0
      %s40 = sshll.u32 %s2, 4
      %s41 = int_to_ptr.hbm [resolvable:$true] %s40
      %s42 = sshll.u32 [#allocation7], 4
      %s43 = int_to_ptr.vmem [resolvable:$true] %s42
      %48 = dma.hbm_to_vmem [thread:$0]  %s41, 1024, %s43, [#allocation6], 64, 64, 4
    $region13: #{tpu_custom_call.1} parent=1 // pred_fallthru
      _
    // Predicated region
    $region14: #{tpu_custom_call.1} parent=1 // pred_check
      _
    $region15: #{tpu_custom_call.1} parent=1 // pred_check_branch
      %50 = sbr.rel (0) target = $region17
    $region16: #{tpu_custom_call.1} parent=1 // pred_region
      _
    $region17: #{tpu_custom_call.1} parent=1 // pred_fallthru
      _
    // Predicated region
    $region18: #{tpu_custom_call.1} parent=1 // pred_check
      _
    $region19: #{tpu_custom_call.1} parent=1 // pred_check_branch
      %52 = sbr.rel (0) target = $region21
    $region20: #{tpu_custom_call.1} parent=1 // pred_region
      %54 = dma.done [#allocation3], 128
    $region21: #{tpu_custom_call.1} parent=1 // pred_fallthru
      _
    // Predicated region
    $region22: #{tpu_custom_call.1} parent=1 // pred_check
      _
    $region23: #{tpu_custom_call.1} parent=1 // pred_check_branch
      %56 = sbr.rel (0) target = $region25
    $region24: #{tpu_custom_call.1} parent=1 // pred_region
      %58 = dma.done [#allocation6], 512
    $region25: #{tpu_custom_call.1} parent=1 // pred_fallthru
      _
    // Predicated region
    $region26: #{tpu_custom_call.1} parent=1 // pred_check
      _
    $region27: #{tpu_custom_call.1} parent=1 // pred_check_branch
      %60 = sbr.rel (0) target = $region29
    $region28: #{tpu_custom_call.1} parent=1 // pred_region
      %62 = dma.done [#allocation6], 1024
    $region29: #{tpu_custom_call.1} parent=1 // pred_fallthru
      _
    %v63 = vld [vmem:[#allocation5] sm:$0xf]
    %v64 = vld [vmem:[#allocation5 + $0x4] sm:$0xf]
    %v65 = vld [vmem:[#allocation5 + $0x8] sm:$0xf]
    %v66 = vld [vmem:[#allocation5 + $0xc] sm:$0xf]
    %v67 = vld [vmem:[#allocation5 + $0x10] sm:$0xf]
    %v68 = vld [vmem:[#allocation5 + $0x14] sm:$0xf]
    %v69 = vld [vmem:[#allocation5 + $0x18] sm:$0xf]
    %v70 = vld [vmem:[#allocation5 + $0x1c] sm:$0xf]
    %v71 = vld [vmem:[#allocation7] sm:$0xf]
    %v72 = vld [vmem:[#allocation7 + $0x4] sm:$0xf]
    %v73 = vld [vmem:[#allocation7 + $0x8] sm:$0xf]
    %v74 = vld [vmem:[#allocation7 + $0xc] sm:$0xf]
    %v75 = vld [vmem:[#allocation7 + $0x10] sm:$0xf]
    %v76 = vld [vmem:[#allocation7 + $0x14] sm:$0xf]
    %v77 = vld [vmem:[#allocation7 + $0x18] sm:$0xf]
    %v78 = vld [vmem:[#allocation7 + $0x1c] sm:$0xf]
    %v79 = vld [vmem:[#allocation7 + $0x20] sm:$0xf]
    %v80 = vld [vmem:[#allocation7 + $0x24] sm:$0xf]
    %v81 = vld [vmem:[#allocation7 + $0x28] sm:$0xf]
    %v82 = vld [vmem:[#allocation7 + $0x2c] sm:$0xf]
    %v83 = vld [vmem:[#allocation7 + $0x30] sm:$0xf]
    %v84 = vld [vmem:[#allocation7 + $0x34] sm:$0xf]
    %v85 = vld [vmem:[#allocation7 + $0x38] sm:$0xf]
    %v86 = vld [vmem:[#allocation7 + $0x3c] sm:$0xf]
    %v87 = vld [vmem:[#allocation2] sm:$0xff]
    %v88 = vld [vmem:[%s3] sm:$0x1]
    %v97 = vunpack.c.l.b16 %v63
    %v98 = vunpack.c.l.b16 %v64
    %v99 = vunpack.c.l.b16 %v65
    %v100 = vunpack.c.l.b16 %v66
    %v101 = vunpack.c.l.b16 %v67
    %v102 = vunpack.c.l.b16 %v68
    %v103 = vunpack.c.l.b16 %v69
    %v104 = vunpack.c.l.b16 %v70
    %v105 = vpack.c.b16 %v98, %v97
    %v106 = vpack.c.b16 %v100, %v99
    %v107 = vpack.c.b16 %v102, %v101
    %v108 = vpack.c.b16 %v104, %v103
    %v129 = vunpack.c.l.b16 %v71
    %v130 = vunpack.c.l.b16 %v72
    %v131 = vunpack.c.l.b16 %v73
    %v132 = vunpack.c.l.b16 %v74
    %v133 = vunpack.c.l.b16 %v75
    %v134 = vunpack.c.l.b16 %v76
    %v135 = vunpack.c.l.b16 %v77
    %v136 = vunpack.c.l.b16 %v78
    %v137 = vunpack.c.l.b16 %v79
    %v138 = vunpack.c.l.b16 %v80
    %v139 = vunpack.c.l.b16 %v81
    %v140 = vunpack.c.l.b16 %v82
    %v141 = vunpack.c.l.b16 %v83
    %v142 = vunpack.c.l.b16 %v84
    %v143 = vunpack.c.l.b16 %v85
    %v144 = vunpack.c.l.b16 %v86
    %v145 = vpack.c.b16 %v130, %v129
    %v146 = vpack.c.b16 %v132, %v131
    %v147 = vpack.c.b16 %v134, %v133
    %v148 = vpack.c.b16 %v136, %v135
    %v149 = vpack.c.b16 %v138, %v137
    %v150 = vpack.c.b16 %v140, %v139
    %v151 = vpack.c.b16 %v142, %v141
    %v152 = vpack.c.b16 %v144, %v143
    %161 = vmatpush.bf16.msra.mxu0 %v152
    %162 = vmatpush.bf16.msra.mxu0 %v151
    %163 = vmatpush.bf16.msra.mxu0 %v150
    %164 = vmatpush.bf16.msra.mxu0 %v149
    %165 = vmatpush.bf16.msra.mxu0 %v148
    %166 = vmatpush.bf16.msra.mxu0 %v147
    %167 = vmatpush.bf16.msra.mxu0 %v146
    %168 = vmatpush.bf16.msra.mxu0 %v145
    %169 = vmatmul.bf16.gmra.mxu0 %v105
    %v170 = vpop.f32.mrf.mxu0
    %v171 = vadd.f32 0.0, %v170
    %v172 = vpop.f32.mrf.mxu0
    %v173 = vadd.f32 0.0, %v172
    %174 = vmatmul.bf16.gmra.mxu0 %v106
    %v175 = vpop.f32.mrf.mxu0
    %v176 = vadd.f32 0.0, %v175
    %v177 = vpop.f32.mrf.mxu0
    %v178 = vadd.f32 0.0, %v177
    %179 = vmatmul.bf16.gmra.mxu0 %v107
    %v180 = vpop.f32.mrf.mxu0
    %v181 = vadd.f32 0.0, %v180
    %v182 = vpop.f32.mrf.mxu0
    %v183 = vadd.f32 0.0, %v182
    %184 = vmatmul.bf16.gmra.mxu0 %v108
    %v185 = vpop.f32.mrf.mxu0
    %v186 = vadd.f32 0.0, %v185
    %v187 = vpop.f32.mrf.mxu0
    %v188 = vadd.f32 0.0, %v187
    %189 = vdwg.mxu0
    %v191 = vrot.slane %v87, 1
    %v192 = vrot.slane %v87, 2
    %v193 = vrot.slane %v87, 3
    %v194 = vrot.slane %v87, 4
    %v195 = vrot.slane %v87, 5
    %v196 = vrot.slane %v87, 6
    %v197 = vrot.slane %v87, 7
    %v198 = vperm.slane %v87, 0
    %v199 = vperm.slane %v191, 0
    %v200 = vperm.slane %v192, 0
    %v201 = vperm.slane %v193, 0
    %v202 = vperm.slane %v194, 0
    %v203 = vperm.slane %v195, 0
    %v204 = vperm.slane %v196, 0
    %v205 = vperm.slane %v197, 0
    %v214 = vadd.f32 %v171, %v198
    %v215 = vadd.f32 %v173, %v199
    %v216 = vadd.f32 %v176, %v200
    %v217 = vadd.f32 %v178, %v201
    %v218 = vadd.f32 %v181, %v202
    %v219 = vadd.f32 %v183, %v203
    %v220 = vadd.f32 %v186, %v204
    %v221 = vadd.f32 %v188, %v205
    %v222 = vtanh.pop %v214
    %v223 = vtanh.pop %v215
    %v224 = vtanh.pop %v216
    %v225 = vtanh.pop %v217
    %v226 = vtanh.pop %v218
    %v227 = vtanh.pop %v219
    %v228 = vtanh.pop %v220
    %v229 = vtanh.pop %v221
    %v231 = vperm.slane %v88, 0
    %v233 = vmul.f32 %v222, %v231
    %v234 = vmul.f32 %v223, %v231
    %v235 = vmul.f32 %v224, %v231
    %v236 = vmul.f32 %v225, %v231
    %v237 = vmul.f32 %v226, %v231
    %v238 = vmul.f32 %v227, %v231
    %v239 = vmul.f32 %v228, %v231
    %v240 = vmul.f32 %v229, %v231
    %241 = vadd.xlane.f32.xlu0 %v233
    %v242 = vpop.xlane.xlu0 %241
    %243 = vadd.xlane.f32.xlu0 %v234
    %v244 = vpop.xlane.xlu0 %243
    %245 = vadd.xlane.f32.xlu0 %v235
    %v246 = vpop.xlane.xlu0 %245
    %247 = vadd.xlane.f32.xlu0 %v236
    %v248 = vpop.xlane.xlu0 %247
    %249 = vadd.xlane.f32.xlu0 %v237
    %v250 = vpop.xlane.xlu0 %249
    %251 = vadd.xlane.f32.xlu0 %v238
    %v252 = vpop.xlane.xlu0 %251
    %253 = vadd.xlane.f32.xlu0 %v239
    %v254 = vpop.xlane.xlu0 %253
    %255 = vadd.xlane.f32.xlu0 %v240
    %v256 = vpop.xlane.xlu0 %255
    %v257 = vadd.f32 %v242, 0.0
    %v258 = vadd.f32 %v244, 0.0
    %v259 = vadd.f32 %v246, 0.0
    %v260 = vadd.f32 %v248, 0.0
    %v261 = vadd.f32 %v250, 0.0
    %v262 = vadd.f32 %v252, 0.0
    %v263 = vadd.f32 %v254, 0.0
    %v264 = vadd.f32 %v256, 0.0
    %v273 = vlaneseq
    %v274 = vand.u32 %v273, 127
    %v275 = vperm.slane %v257, %v274
    %v276 = vperm.slane %v258, %v274
    %v277 = vperm.slane %v259, %v274
    %v278 = vperm.slane %v260, %v274
    %v279 = vperm.slane %v261, %v274
    %v280 = vperm.slane %v262, %v274
    %v281 = vperm.slane %v263, %v274
    %v282 = vperm.slane %v264, %v274
    %vm283 = vcmask 1041409
    %v284 = vsel %vm283, %v276, %v275
    %vm285 = vcmask 1042434
    %v286 = vsel %vm285, %v277, %v284
    %vm287 = vcmask 1043459
    %v288 = vsel %vm287, %v278, %v286
    %vm289 = vcmask 1044484
    %v290 = vsel %vm289, %v279, %v288
    %vm291 = vcmask 1045509
    %v292 = vsel %vm291, %v280, %v290
    %vm293 = vcmask 1046534
    %v294 = vsel %vm293, %v281, %v292
    %vm295 = vcmask 1047559
    %v296 = vsel %vm295, %v282, %v294
    %vm298 = vcmask 64512
    %v299 = vsel %vm298, %v296, -inf
    %300 = vmax.xlane.f32.xlu0 %v299
    %v301 = vpop.xlane.xlu0 %300
    %v303 = vperm.slane %v301, 0
    %v304 = vperm.slane %v301, 1
    %v305 = vperm.slane %v301, 2
    %v306 = vperm.slane %v301, 3
    %v307 = vperm.slane %v301, 4
    %v308 = vperm.slane %v301, 5
    %v309 = vperm.slane %v301, 6
    %v310 = vperm.slane %v301, 7
    %v319 = vsub.f32 %v257, %v303
    %v320 = vsub.f32 %v258, %v304
    %v321 = vsub.f32 %v259, %v305
    %v322 = vsub.f32 %v260, %v306
    %v323 = vsub.f32 %v261, %v307
    %v324 = vsub.f32 %v262, %v308
    %v325 = vsub.f32 %v263, %v309
    %v326 = vsub.f32 %v264, %v310
    %v327 = vmul.f32 %v319, 1.442695
    %v328 = vpow.pop %v327
    %v329 = vmul.f32 %v320, 1.442695
    %v330 = vpow.pop %v329
    %v331 = vmul.f32 %v321, 1.442695
    %v332 = vpow.pop %v331
    %v333 = vmul.f32 %v322, 1.442695
    %v334 = vpow.pop %v333
    %v335 = vmul.f32 %v323, 1.442695
    %v336 = vpow.pop %v335
    %v337 = vmul.f32 %v324, 1.442695
    %v338 = vpow.pop %v337
    %v339 = vmul.f32 %v325, 1.442695
    %v340 = vpow.pop %v339
    %v341 = vmul.f32 %v326, 1.442695
    %v342 = vpow.pop %v341
    %351 = vset.pattern.permute.xlu0 0
    %352 = vperm.xlu0 %351, %v328
    %v353 = vpop.permute.xlu0 %352
    %354 = vset.pattern.permute.xlu0 0
    %355 = vperm.xlu0 %354, %v330
    %v356 = vpop.permute.xlu0 %355
    %357 = vset.pattern.permute.xlu0 0
    %358 = vperm.xlu0 %357, %v332
    %v359 = vpop.permute.xlu0 %358
    %360 = vset.pattern.permute.xlu0 0
    %361 = vperm.xlu0 %360, %v334
    %v362 = vpop.permute.xlu0 %361
    %363 = vset.pattern.permute.xlu0 0
    %364 = vperm.xlu0 %363, %v336
    %v365 = vpop.permute.xlu0 %364
    %366 = vset.pattern.permute.xlu0 0
    %367 = vperm.xlu0 %366, %v338
    %v368 = vpop.permute.xlu0 %367
    %369 = vset.pattern.permute.xlu0 0
    %370 = vperm.xlu0 %369, %v340
    %v371 = vpop.permute.xlu0 %370
    %372 = vset.pattern.permute.xlu0 0
    %373 = vperm.xlu0 %372, %v342
    %v374 = vpop.permute.xlu0 %373
    %v375 = vperm.slane %v353, %v274
    %v376 = vperm.slane %v356, %v274
    %v377 = vperm.slane %v359, %v274
    %v378 = vperm.slane %v362, %v274
    %v379 = vperm.slane %v365, %v274
    %v380 = vperm.slane %v368, %v274
    %v381 = vperm.slane %v371, %v274
    %v382 = vperm.slane %v374, %v274
    %v383 = vsel %vm283, %v376, %v375
    %v384 = vsel %vm285, %v377, %v383
    %v385 = vsel %vm287, %v378, %v384
    %v386 = vsel %vm289, %v379, %v385
    %v387 = vsel %vm291, %v380, %v386
    %v388 = vsel %vm293, %v381, %v387
    %v389 = vsel %vm295, %v382, %v388
    %v391 = vsel %vm298, %v389, 0.0
    %392 = vadd.xlane.f32.xlu0 %v391
    %v393 = vpop.xlane.xlu0 %392
    %v394 = vrcp.pop %v393
    %v396 = vperm.slane %v394, 0
    %v397 = vperm.slane %v394, 1
    %v398 = vperm.slane %v394, 2
    %v399 = vperm.slane %v394, 3
    %v400 = vperm.slane %v394, 4
    %v401 = vperm.slane %v394, 5
    %v402 = vperm.slane %v394, 6
    %v403 = vperm.slane %v394, 7
    %v412 = vmul.f32 %v328, %v396
    %v413 = vmul.f32 %v330, %v397
    %v414 = vmul.f32 %v332, %v398
    %v415 = vmul.f32 %v334, %v399
    %v416 = vmul.f32 %v336, %v400
    %v417 = vmul.f32 %v338, %v401
    %v418 = vmul.f32 %v340, %v402
    %v419 = vmul.f32 %v342, %v403
    %428 = vset.pattern.permute.xlu0 0
    %429 = vperm.xlu0 %428, %v412
    %v430 = vpop.permute.xlu0 %429
    %431 = vset.pattern.permute.xlu0 0
    %432 = vperm.xlu0 %431, %v413
    %v433 = vpop.permute.xlu0 %432
    %434 = vset.pattern.permute.xlu0 0
    %435 = vperm.xlu0 %434, %v414
    %v436 = vpop.permute.xlu0 %435
    %437 = vset.pattern.permute.xlu0 0
    %438 = vperm.xlu0 %437, %v415
    %v439 = vpop.permute.xlu0 %438
    %440 = vset.pattern.permute.xlu0 0
    %441 = vperm.xlu0 %440, %v416
    %v442 = vpop.permute.xlu0 %441
    %443 = vset.pattern.permute.xlu0 0
    %444 = vperm.xlu0 %443, %v417
    %v445 = vpop.permute.xlu0 %444
    %446 = vset.pattern.permute.xlu0 0
    %447 = vperm.xlu0 %446, %v418
    %v448 = vpop.permute.xlu0 %447
    %449 = vset.pattern.permute.xlu0 0
    %450 = vperm.xlu0 %449, %v419
    %v451 = vpop.permute.xlu0 %450
    %v452 = vperm.slane %v430, %v274
    %v453 = vperm.slane %v433, %v274
    %v454 = vperm.slane %v436, %v274
    %v455 = vperm.slane %v439, %v274
    %v456 = vperm.slane %v442, %v274
    %v457 = vperm.slane %v445, %v274
    %v458 = vperm.slane %v448, %v274
    %v459 = vperm.slane %v451, %v274
    %v460 = vsel %vm283, %v453, %v452
    %v461 = vsel %vm285, %v454, %v460
    %v462 = vsel %vm287, %v455, %v461
    %v463 = vsel %vm289, %v456, %v462
    %v464 = vsel %vm291, %v457, %v463
    %v465 = vsel %vm293, %v458, %v464
    %v466 = vsel %vm295, %v459, %v465
    %468 = vst.msk [vmem:[#allocation8] sm:$0xff] %vm298, %v466
    // Predicated region
    $region30: #{tpu_custom_call.1} parent=1 // pred_check
      _
    $region31: #{tpu_custom_call.1} parent=1 // pred_check_branch
      %470 = sbr.rel (0) target = $region33
    $region32: #{tpu_custom_call.1} parent=1 // pred_region
      %472 = vsyncadd [#allocation4], 0
      %s474 = sshll.u32 [#allocation8], 4
      %s475 = int_to_ptr.vmem [resolvable:$true] %s474
      %s476 = sshll.u32 %s4, 4
      %s477 = int_to_ptr.hbm [resolvable:$true] %s476
      %479 = dma.vmem_to_hbm [thread:$0]  %s475, 128, %s477, [#allocation4]
    $region33: #{tpu_custom_call.1} parent=1 // pred_fallthru
      _
    // Predicated region
    $region34: #{tpu_custom_call.1} parent=1 // pred_check
      _
    $region35: #{tpu_custom_call.1} parent=1 // pred_check_branch
      %481 = sbr.rel (0) target = $region37
    $region36: #{tpu_custom_call.1} parent=1 // pred_region
      %483 = dma.done [#allocation4], 128
    $region37: #{tpu_custom_call.1} parent=1 // pred_fallthru
      _
    %484 = vsyncpa [#allocation3], 1
    %485 = vsyncpa [#allocation6], 1
    %486 = vsyncpa [#allocation4], 1

</llo_original>
